<compile_context>
chip_gen: v7x
topology: tpu7x:2x2x1
jax: 0.10.0
libtpu: 0.0.40
codegen_flags: <defaults>
</compile_context>

<pallas_src>
import functools

import jax
import jax.numpy as jnp
from jax import lax
from jax.experimental import pallas as pl
from jax.experimental.pallas import tpu as pltpu


def _round_up(a, b):
    return ((a + b - 1) // b) * b


def _adapter_kernel(x_ref, wd_ref, bd_ref, wu_ref, bu_ref, o_ref, *, matmul_dtype):
    # x_ref:  (tm, Hp)  tile of flattened (padded) input
    # wd_ref: (Hp, Lp)  down_proj weight (transposed vs. torch)
    # bd_ref: (1,  Lp)  down_proj bias
    # wu_ref: (Lp, Hp)  up_proj weight (transposed vs. torch)
    # bu_ref: (1,  Hp)  up_proj bias
    x = x_ref[...]
    xm = x.astype(matmul_dtype)
    h = jnp.dot(xm, wd_ref[...].astype(matmul_dtype),
                preferred_element_type=jnp.float32,
                precision=lax.Precision.HIGHEST) + bd_ref[...]
    h = jnp.tanh(h)  # f32 elementwise on the VPU/EUP (v5e has no bf16 VPU/EUP)
    up = jnp.dot(h.astype(matmul_dtype), wu_ref[...].astype(matmul_dtype),
                 preferred_element_type=jnp.float32,
                 precision=lax.Precision.HIGHEST) + bu_ref[...]
    o_ref[...] = (x + up).astype(o_ref.dtype)


def adapter_forward(x, w_down, b_down, w_up, b_up, *, max_tm=512, matmul_dtype=None):
    """x: (B, S, H). w_down: (H, L), b_down: (L,), w_up: (L, H), b_up: (H,).

    matmul_dtype: optionally jnp.bfloat16 on v6e/v7x for MXU throughput (f32 accumulate);
    default None keeps x.dtype for exact parity with the f32 reference.
    """
    B, S, H = x.shape
    L = w_down.shape[1]
    M = B * S
    if matmul_dtype is None:
        matmul_dtype = x.dtype
    matmul_dtype = jnp.dtype(matmul_dtype)

    # Lane-align feature dims (multiples of 128); row tile multiple of 8.
    Hp = _round_up(H, 128)
    Lp = _round_up(L, 128)
    tm = min(max_tm, _round_up(M, 8))
    Mp = _round_up(M, tm)

    x2 = jnp.pad(x.reshape(M, H), ((0, Mp - M), (0, Hp - H)))
    wd = jnp.pad(w_down, ((0, Hp - H), (0, Lp - L)))
    wu = jnp.pad(w_up, ((0, Lp - L), (0, Hp - H)))
    bd = jnp.pad(b_down, (0, Lp - L)).reshape(1, Lp)
    bu = jnp.pad(b_up, (0, Hp - H)).reshape(1, Hp)

    # VMEM budget: double-buffered x/out tiles + resident (double-buffered) weights/biases.
    itemsize = jnp.dtype(x.dtype).itemsize
    est = (4 * tm * Hp * itemsize
           + 2 * (Hp * Lp + Lp * Hp + Lp + Hp) * 4
           + (1 << 20))
    vmem_limit = int(min(max(est, 32 * 1024 * 1024), 48 * 1024 * 1024))

    kernel = functools.partial(_adapter_kernel, matmul_dtype=matmul_dtype)

    out2 = pl.pallas_call(
        kernel,
        out_shape=jax.ShapeDtypeStruct((Mp, Hp), x.dtype),
        grid_spec=pltpu.PrefetchScalarGridSpec(
            num_scalar_prefetch=0,
            grid=(Mp // tm,),
            in_specs=[
                pl.BlockSpec((tm, Hp), lambda i: (i, 0)),   # x tile (pipelined over rows)
                pl.BlockSpec((Hp, Lp), lambda i: (0, 0)),   # down weight (resident)
                pl.BlockSpec((1, Lp), lambda i: (0, 0)),    # down bias
                pl.BlockSpec((Lp, Hp), lambda i: (0, 0)),   # up weight (resident)
                pl.BlockSpec((1, Hp), lambda i: (0, 0)),    # up bias
            ],
            out_specs=pl.BlockSpec((tm, Hp), lambda i: (i, 0)),
        ),
        compiler_params=pltpu.CompilerParams(
            dimension_semantics=("parallel",),
            vmem_limit_bytes=vmem_limit,
        ),
    )(x2, wd, bd, wu, bu)

    return out2[:M, :H].reshape(B, S, H)


if __name__ == "__main__":
    # config.hidden = 32, config.adapter_latent = 16
    B, S, H, L = 2, 8, 32, 16

    key = jax.random.PRNGKey(0)
    kx, kwd, kwu = jax.random.split(key, 3)

    x = jax.random.normal(kx, (B, S, H), dtype=jnp.float32)

    # torch init: weight ~ N(0, 0.02), bias = 0. Stored as (in, out) == torch W.T.
    w_down = 0.02 * jax.random.normal(kwd, (H, L), dtype=jnp.float32)
    b_down = jnp.zeros((L,), dtype=jnp.float32)
    w_up = 0.02 * jax.random.normal(kwu, (L, H), dtype=jnp.float32)
    b_up = jnp.zeros((H,), dtype=jnp.float32)

    out = adapter_forward(x, w_down, b_down, w_up, b_up)
    out = jax.block_until_ready(out)

    # Pure-JAX reference (HIGHEST precision so both sides are true-f32 matmuls).
    x2d = x.reshape(B * S, H)
    h_ref = jnp.tanh(jnp.dot(x2d, w_down, precision=lax.Precision.HIGHEST) + b_down)
    up_ref = jnp.dot(h_ref, w_up, precision=lax.Precision.HIGHEST) + b_up
    ref = (x2d + up_ref).reshape(B, S, H)

    assert jnp.allclose(out, ref, atol=1e-5, rtol=1e-5), "mismatch vs reference"

    print("KERNEL_OK")
</pallas_src>

<mosaic_0001>
module attributes {stable_mosaic.version = 11 : i64} {
  func.func @_adapter_kernel(%arg0: i32, %arg1: memref<16x128xf32, #tpu.memory_space<vmem>>, %arg2: memref<128x128xf32, #tpu.memory_space<vmem>>, %arg3: memref<1x128xf32, #tpu.memory_space<vmem>>, %arg4: memref<128x128xf32, #tpu.memory_space<vmem>>, %arg5: memref<1x128xf32, #tpu.memory_space<vmem>>, %arg6: memref<16x128xf32, #tpu.memory_space<vmem>>) attributes {dimension_semantics = [#tpu.dimension_semantics<parallel>], iteration_bounds = array<i64: 1>, scalar_prefetch = 0 : i64, scratch_operands = 0 : i64, tpu.core_type = #tpu.core_type<tc>, window_params = [{transform_indices = @transform_0, window_bounds = array<i64: 16, 128>}, {pipeline_mode = #tpu.pipeline_mode<synchronous>, transform_indices = @transform_1, window_bounds = array<i64: 128, 128>}, {pipeline_mode = #tpu.pipeline_mode<synchronous>, transform_indices = @transform_2, window_bounds = array<i64: 1, 128>}, {pipeline_mode = #tpu.pipeline_mode<synchronous>, transform_indices = @transform_3, window_bounds = array<i64: 128, 128>}, {pipeline_mode = #tpu.pipeline_mode<synchronous>, transform_indices = @transform_4, window_bounds = array<i64: 1, 128>}, {transform_indices = @transform_5, window_bounds = array<i64: 16, 128>}]} {
    %c0 = arith.constant 0 : index
    %c0_0 = arith.constant 0 : index
    %0 = vector.load %arg1[%c0, %c0_0] : memref<16x128xf32, #tpu.memory_space<vmem>>, vector<16x128xf32>
    %c0_1 = arith.constant 0 : index
    %c0_2 = arith.constant 0 : index
    %1 = vector.load %arg2[%c0_1, %c0_2] : memref<128x128xf32, #tpu.memory_space<vmem>>, vector<128x128xf32>
    %cst = arith.constant dense<0.000000e+00> : vector<16x128xf32>
    %2 = tpu.matmul %0, %1, %cst {dimension_numbers = #tpu.dot_dimension_numbers<[1], [0], [0], [1], [0, 0, 1, 1], [], []>, precision = #tpu.contract_precision<fp32>} : vector<16x128xf32>, vector<128x128xf32>, vector<16x128xf32> -> vector<16x128xf32>
    %c0_3 = arith.constant 0 : index
    %c0_4 = arith.constant 0 : index
    %3 = vector.load %arg3[%c0_3, %c0_4] : memref<1x128xf32, #tpu.memory_space<vmem>>, vector<1x128xf32>
    %4 = vector.broadcast %3 : vector<1x128xf32> to vector<16x128xf32>
    %5 = arith.addf %2, %4 : vector<16x128xf32>
    %6 = math.tanh %5 : vector<16x128xf32>
    %c0_5 = arith.constant 0 : index
    %c0_6 = arith.constant 0 : index
    %7 = vector.load %arg4[%c0_5, %c0_6] : memref<128x128xf32, #tpu.memory_space<vmem>>, vector<128x128xf32>
    %cst_7 = arith.constant dense<0.000000e+00> : vector<16x128xf32>
    %8 = tpu.matmul %6, %7, %cst_7 {dimension_numbers = #tpu.dot_dimension_numbers<[1], [0], [0], [1], [0, 0, 1, 1], [], []>, precision = #tpu.contract_precision<fp32>} : vector<16x128xf32>, vector<128x128xf32>, vector<16x128xf32> -> vector<16x128xf32>
    %c0_8 = arith.constant 0 : index
    %c0_9 = arith.constant 0 : index
    %9 = vector.load %arg5[%c0_8, %c0_9] : memref<1x128xf32, #tpu.memory_space<vmem>>, vector<1x128xf32>
    %10 = vector.broadcast %9 : vector<1x128xf32> to vector<16x128xf32>
    %11 = arith.addf %8, %10 : vector<16x128xf32>
    %12 = arith.addf %0, %11 : vector<16x128xf32>
    %c0_10 = arith.constant 0 : index
    %c0_11 = arith.constant 0 : index
    %13 = vector.load %arg6[%c0_10, %c0_11] : memref<16x128xf32, #tpu.memory_space<vmem>>, vector<16x128xf32>
    tpu.vector_store %arg6[%c0_10, %c0_11], %12 {strides = array<i32>} : memref<16x128xf32, #tpu.memory_space<vmem>>, vector<16x128xf32>,
    return
  }
  func.func @transform_0(%arg0: i32) -> (i32, i32) {
    %c0_i32 = arith.constant 0 : i32
    %c0_i32_0 = arith.constant 0 : i32
    return %arg0, %c0_i32 : i32, i32
  }
  func.func @transform_1(%arg0: i32) -> (i32, i32) {
    %c0_i32 = arith.constant 0 : i32
    %c0_i32_0 = arith.constant 0 : i32
    %c0_i32_1 = arith.constant 0 : i32
    return %c0_i32, %c0_i32_0 : i32, i32
  }
  func.func @transform_2(%arg0: i32) -> (i32, i32) {
    %c0_i32 = arith.constant 0 : i32
    %c0_i32_0 = arith.constant 0 : i32
    %c0_i32_1 = arith.constant 0 : i32
    return %c0_i32, %c0_i32_0 : i32, i32
  }
  func.func @transform_3(%arg0: i32) -> (i32, i32) {
    %c0_i32 = arith.constant 0 : i32
    %c0_i32_0 = arith.constant 0 : i32
    %c0_i32_1 = arith.constant 0 : i32
    return %c0_i32, %c0_i32_0 : i32, i32
  }
  func.func @transform_4(%arg0: i32) -> (i32, i32) {
    %c0_i32 = arith.constant 0 : i32
    %c0_i32_0 = arith.constant 0 : i32
    %c0_i32_1 = arith.constant 0 : i32
    return %c0_i32, %c0_i32_0 : i32, i32
  }
  func.func @transform_5(%arg0: i32) -> (i32, i32) {
    %c0_i32 = arith.constant 0 : i32
    %c0_i32_0 = arith.constant 0 : i32
    return %arg0, %c0_i32 : i32, i32
  }
}

</mosaic_0001>

<llo_original>
// kernel: tpu_custom_call.1
$region0: #{tpu_custom_call.1}
  #allocation0 [shape = 'u32[]', space=smem, size = 0x4, offset = 0x4, fixed_abs, tag = 'smem constant byte address 0x4 - core index']
  #allocation1 [shape = 'u32[144,128]{1,0:T(1,128)}', space=vmem, size = 0x12000, scoped, tag = 'internal scratch']
  %s0 = inlined_call_operand.hbm [shape: f32[16,128], index: 0, kind: input, shape index: {}]
  %s1 = inlined_call_operand.hbm [shape: f32[128,128], index: 1, kind: input, shape index: {}]
  %s2 = inlined_call_operand.vmem [shape: f32[1,128], index: 2, kind: input, shape index: {}]
  %s3 = inlined_call_operand.hbm [shape: f32[128,128], index: 3, kind: input, shape index: {}]
  %s4 = inlined_call_operand.vmem [shape: f32[1,128], index: 4, kind: input, shape index: {}]
  %s5 = inlined_call_operand.hbm [shape: f32[16,128], index: 5, kind: output, shape index: {}]
  %s6 = sld [smem:[#allocation0]]
  $region42: #{tpu_custom_call.1} parent=0
    _
  %s8 = ssub.s32 1, %s6
  %s9 = scalar_select 0, %s8, %s6
  $region1: #{tpu_custom_call.1} parent=0
    #allocation2 [shape = 'u8[8192]{0}', space=vmem, size = 0x2000, scoped, tag = 'input window, operand 0, single buffered']
    #allocation3 [shape = 's32[1]{0}', space=sflag, size = 0x4, scoped, tag = 'scoped memory for tpu_custom_call.1']
    #allocation4 [shape = 's32[1]{0}', space=sflag, size = 0x4, scoped, tag = 'scoped memory for tpu_custom_call.1']
    #allocation5 [shape = 'u8[65536]{0}', space=vmem, size = 0x10000, scoped, tag = 'input window, operand 1, single buffered']
    #allocation6 [shape = 's32[1]{0}', space=sflag, size = 0x4, scoped, tag = 'scoped memory for tpu_custom_call.1']
    #allocation7 [shape = 'u8[65536]{0}', space=vmem, size = 0x10000, scoped, tag = 'input window, operand 3, single buffered']
    #allocation8 [shape = 'u8[8192]{0}', space=vmem, size = 0x2000, scoped, tag = 'output window, operand 0, single buffered']
    %10 = vsyncpa [#allocation3], 0
    %11 = vsyncpa [#allocation6], 0
    %12 = vsyncpa [#allocation4], 0
    // Predicated region
    $region2: #{tpu_custom_call.1} parent=1 // pred_check
      _
    $region3: #{tpu_custom_call.1} parent=1 // pred_check_branch
      %14 = sbr.rel (0) target = $region5
    $region4: #{tpu_custom_call.1} parent=1 // pred_region
      %s16 = ssub.s32 256, 256
      %17 = vsyncadd [#allocation3], %s16
      %s18 = sshll.u32 [#allocation2], 4
      %s19 = int_to_ptr.vmem [resolvable:$true] %s18
      %24 = dma.hbm_to_vmem [thread:$0]  %s0, 256, %s19, [#allocation3], 128, 128, 8
    $region5: #{tpu_custom_call.1} parent=1 // pred_fallthru
      _
    // Predicated region
    $region6: #{tpu_custom_call.1} parent=1 // pred_check
      _
    $region7: #{tpu_custom_call.1} parent=1 // pred_check_branch
      %26 = sbr.rel (0) target = $region9
    $region8: #{tpu_custom_call.1} parent=1 // pred_region
      %s28 = ssub.s32 2048, 2048
      %29 = vsyncadd [#allocation6], %s28
      %s30 = sshll.u32 [#allocation5], 4
      %s31 = int_to_ptr.vmem [resolvable:$true] %s30
      %36 = dma.hbm_to_vmem [thread:$0]  %s1, 2048, %s31, [#allocation6], 128, 128, 8
    $region9: #{tpu_custom_call.1} parent=1 // pred_fallthru
      _
    // Predicated region
    $region10: #{tpu_custom_call.1} parent=1 // pred_check
      _
    $region11: #{tpu_custom_call.1} parent=1 // pred_check_branch
      %38 = sbr.rel (0) target = $region13
    $region12: #{tpu_custom_call.1} parent=1 // pred_region
      _
    $region13: #{tpu_custom_call.1} parent=1 // pred_fallthru
      _
    // Predicated region
    $region14: #{tpu_custom_call.1} parent=1 // pred_check
      _
    $region15: #{tpu_custom_call.1} parent=1 // pred_check_branch
      %40 = sbr.rel (0) target = $region17
    $region16: #{tpu_custom_call.1} parent=1 // pred_region
      %s42 = ssub.s32 2048, 2048
      %43 = vsyncadd [#allocation6], %s42
      %s44 = sshll.u32 [#allocation7], 4
      %s45 = int_to_ptr.vmem [resolvable:$true] %s44
      %50 = dma.hbm_to_vmem [thread:$0]  %s3, 2048, %s45, [#allocation6], 128, 128, 8
    $region17: #{tpu_custom_call.1} parent=1 // pred_fallthru
      _
    // Predicated region
    $region18: #{tpu_custom_call.1} parent=1 // pred_check
      _
    $region19: #{tpu_custom_call.1} parent=1 // pred_check_branch
      %52 = sbr.rel (0) target = $region21
    $region20: #{tpu_custom_call.1} parent=1 // pred_region
      _
    $region21: #{tpu_custom_call.1} parent=1 // pred_fallthru
      _
    // Predicated region
    $region22: #{tpu_custom_call.1} parent=1 // pred_check
      _
    $region23: #{tpu_custom_call.1} parent=1 // pred_check_branch
      %54 = sbr.rel (0) target = $region25
    $region24: #{tpu_custom_call.1} parent=1 // pred_region
      %55 = dma.done [#allocation3], 256
    $region25: #{tpu_custom_call.1} parent=1 // pred_fallthru
      _
    // Predicated region
    $region26: #{tpu_custom_call.1} parent=1 // pred_check
      _
    $region27: #{tpu_custom_call.1} parent=1 // pred_check_branch
      %57 = sbr.rel (0) target = $region29
    $region28: #{tpu_custom_call.1} parent=1 // pred_region
      %58 = dma.done [#allocation6], 2048
    $region29: #{tpu_custom_call.1} parent=1 // pred_fallthru
      _
    // Predicated region
    $region30: #{tpu_custom_call.1} parent=1 // pred_check
      _
    $region31: #{tpu_custom_call.1} parent=1 // pred_check_branch
      %60 = sbr.rel (0) target = $region33
    $region32: #{tpu_custom_call.1} parent=1 // pred_region
      %61 = dma.done [#allocation6], 2048
    $region33: #{tpu_custom_call.1} parent=1 // pred_fallthru
      _
    %v62 = vld [vmem:[#allocation2] sm:$0xff]
    %v63 = vld [vmem:[#allocation2 + $0x8] sm:$0xff]
    %v64 = vld [vmem:[#allocation5] sm:$0xff]
    %v65 = vld [vmem:[#allocation5 + $0x8] sm:$0xff]
    %v66 = vld [vmem:[#allocation5 + $0x10] sm:$0xff]
    %v67 = vld [vmem:[#allocation5 + $0x18] sm:$0xff]
    %v68 = vld [vmem:[#allocation5 + $0x20] sm:$0xff]
    %v69 = vld [vmem:[#allocation5 + $0x28] sm:$0xff]
    %v70 = vld [vmem:[#allocation5 + $0x30] sm:$0xff]
    %v71 = vld [vmem:[#allocation5 + $0x38] sm:$0xff]
    %v72 = vld [vmem:[#allocation5 + $0x40] sm:$0xff]
    %v73 = vld [vmem:[#allocation5 + $0x48] sm:$0xff]
    %v74 = vld [vmem:[#allocation5 + $0x50] sm:$0xff]
    %v75 = vld [vmem:[#allocation5 + $0x58] sm:$0xff]
    %v76 = vld [vmem:[#allocation5 + $0x60] sm:$0xff]
    %v77 = vld [vmem:[#allocation5 + $0x68] sm:$0xff]
    %v78 = vld [vmem:[#allocation5 + $0x70] sm:$0xff]
    %v79 = vld [vmem:[#allocation5 + $0x78] sm:$0xff]
    %v80 = vld [vmem:[%s2] sm:$0x1]
    %v82 = vlaneseq
    %v83 = vshrl.u32 %v82, 7
    %v84 = vsub.s32 0, %v83
    %v85 = vrot.slane %v80, %v84
    %87 = vmatprep.subr.mxu0 0.0
    %v88 = vand.u32 %v64, 4294901760
    %89 = vmatpush1.msra.mxu0 %v88
    %90 = vmatprep.subr.mxu0 0.0
    %v91 = vand.u32 %v65, 4294901760
    %92 = vmatpush1.msra.mxu0 %v91
    %93 = vmatprep.subr.mxu0 0.0
    %v94 = vand.u32 %v66, 4294901760
    %95 = vmatpush1.msra.mxu0 %v94
    %96 = vmatprep.subr.mxu0 0.0
    %v97 = vand.u32 %v67, 4294901760
    %98 = vmatpush1.msra.mxu0 %v97
    %99 = vmatprep.subr.mxu0 0.0
    %v100 = vand.u32 %v68, 4294901760
    %101 = vmatpush1.msra.mxu0 %v100
    %102 = vmatprep.subr.mxu0 0.0
    %v103 = vand.u32 %v69, 4294901760
    %104 = vmatpush1.msra.mxu0 %v103
    %105 = vmatprep.subr.mxu0 0.0
    %v106 = vand.u32 %v70, 4294901760
    %107 = vmatpush1.msra.mxu0 %v106
    %108 = vmatprep.subr.mxu0 0.0
    %v109 = vand.u32 %v71, 4294901760
    %110 = vmatpush1.msra.mxu0 %v109
    %111 = vmatprep.subr.mxu0 0.0
    %v112 = vand.u32 %v72, 4294901760
    %113 = vmatpush1.msra.mxu0 %v112
    %114 = vmatprep.subr.mxu0 0.0
    %v115 = vand.u32 %v73, 4294901760
    %116 = vmatpush1.msra.mxu0 %v115
    %117 = vmatprep.subr.mxu0 0.0
    %v118 = vand.u32 %v74, 4294901760
    %119 = vmatpush1.msra.mxu0 %v118
    %120 = vmatprep.subr.mxu0 0.0
    %v121 = vand.u32 %v75, 4294901760
    %122 = vmatpush1.msra.mxu0 %v121
    %123 = vmatprep.subr.mxu0 0.0
    %v124 = vand.u32 %v76, 4294901760
    %125 = vmatpush1.msra.mxu0 %v124
    %126 = vmatprep.subr.mxu0 0.0
    %v127 = vand.u32 %v77, 4294901760
    %128 = vmatpush1.msra.mxu0 %v127
    %129 = vmatprep.subr.mxu0 0.0
    %v130 = vand.u32 %v78, 4294901760
    %131 = vmatpush1.msra.mxu0 %v130
    %132 = vmatprep.subr.mxu0 0.0
    %v133 = vand.u32 %v79, 4294901760
    %134 = vmatpush1.msra.mxu0 %v133
    %135 = vmatprep.subr.mxu0 0.0
    %136 = vmatpush1.msra.mxu0 0.0
    %137 = vmatprep.subr.mxu0 0.0
    %138 = vmatpush1.msra.mxu0 0.0
    %139 = vmatprep.subr.mxu0 0.0
    %140 = vmatpush1.msra.mxu0 0.0
    %141 = vmatprep.subr.mxu0 0.0
    %142 = vmatpush1.msra.mxu0 0.0
    %143 = vmatprep.subr.mxu0 0.0
    %144 = vmatpush1.msra.mxu0 0.0
    %145 = vmatprep.subr.mxu0 0.0
    %146 = vmatpush1.msra.mxu0 0.0
    %147 = vmatprep.subr.mxu0 0.0
    %148 = vmatpush1.msra.mxu0 0.0
    %149 = vmatprep.subr.mxu0 0.0
    %150 = vmatpush1.msra.mxu0 0.0
    %151 = vmatprep.subr.mxu0 0.0
    %152 = vmatpush1.msra.mxu0 0.0
    %153 = vmatprep.subr.mxu0 0.0
    %154 = vmatpush1.msra.mxu0 0.0
    %155 = vmatprep.subr.mxu0 0.0
    %156 = vmatpush1.msra.mxu0 0.0
    %157 = vmatprep.subr.mxu0 0.0
    %158 = vmatpush1.msra.mxu0 0.0
    %159 = vmatprep.subr.mxu0 0.0
    %160 = vmatpush1.msra.mxu0 0.0
    %161 = vmatprep.subr.mxu0 0.0
    %162 = vmatpush1.msra.mxu0 0.0
    %163 = vmatprep.subr.mxu0 0.0
    %164 = vmatpush1.msra.mxu0 0.0
    %165 = vmatprep.subr.mxu0 0.0
    %166 = vmatpush1.msra.mxu0 0.0
    %167 = vmatprep.mubr.f32.mxu0 0.0
    %v168 = vand.u32 %v62, 4294901760
    %v169 = vsub.f32 %v62, %v168
    %v170 = vand.u32 %v169, 4294901760
    %v171 = vsub.f32 %v169, %v170
    %v172 = vand.u32 %v171, 4294901760
    %173 = vmatmul.mubr.f32.gmra.mrb[0].mxu0 %v172
    %v174 = vpop.f32.mrb[0].mxu0
    %v175 = vadd.f32 %v85, %v174
    %v176 = vpop.f32.mrb[0].mxu0
    %177 = vmatprep.mubr.f32.mxu0 0.0
    %v178 = vand.u32 %v63, 4294901760
    %v179 = vsub.f32 %v63, %v178
    %v180 = vand.u32 %v179, 4294901760
    %v181 = vsub.f32 %v179, %v180
    %v182 = vand.u32 %v181, 4294901760
    %183 = vmatmul.mubr.f32.gmra.mrb[0].mxu0 %v182
    %v184 = vpop.f32.mrb[0].mxu0
    %v185 = vadd.f32 %v85, %v184
    %v186 = vpop.f32.mrb[0].mxu0
    %187 = vdwg.mxu0
    %188 = vmatprep.subr.mxu0 0.0
    %v189 = vand.u32 %v64, 4294901760
    %v190 = vsub.f32 %v64, %v189
    %v191 = vand.u32 %v190, 4294901760
    %v192 = vsub.f32 %v190, %v191
    %v193 = vand.u32 %v192, 4294901760
    %194 = vmatpush1.msra.mxu0 %v193
    %195 = vmatprep.subr.mxu0 0.0
    %v196 = vand.u32 %v65, 4294901760
    %v197 = vsub.f32 %v65, %v196
    %v198 = vand.u32 %v197, 4294901760
    %v199 = vsub.f32 %v197, %v198
    %v200 = vand.u32 %v199, 4294901760
    %201 = vmatpush1.msra.mxu0 %v200
    %202 = vmatprep.subr.mxu0 0.0
    %v203 = vand.u32 %v66, 4294901760
    %v204 = vsub.f32 %v66, %v203
    %v205 = vand.u32 %v204, 4294901760
    %v206 = vsub.f32 %v204, %v205
    %v207 = vand.u32 %v206, 4294901760
    %208 = vmatpush1.msra.mxu0 %v207
    %209 = vmatprep.subr.mxu0 0.0
    %v210 = vand.u32 %v67, 4294901760
    %v211 = vsub.f32 %v67, %v210
    %v212 = vand.u32 %v211, 4294901760
    %v213 = vsub.f32 %v211, %v212
    %v214 = vand.u32 %v213, 4294901760
    %215 = vmatpush1.msra.mxu0 %v214
    %216 = vmatprep.subr.mxu0 0.0
    %v217 = vand.u32 %v68, 4294901760
    %v218 = vsub.f32 %v68, %v217
    %v219 = vand.u32 %v218, 4294901760
    %v220 = vsub.f32 %v218, %v219
    %v221 = vand.u32 %v220, 4294901760
    %222 = vmatpush1.msra.mxu0 %v221
    %223 = vmatprep.subr.mxu0 0.0
    %v224 = vand.u32 %v69, 4294901760
    %v225 = vsub.f32 %v69, %v224
    %v226 = vand.u32 %v225, 4294901760
    %v227 = vsub.f32 %v225, %v226
    %v228 = vand.u32 %v227, 4294901760
    %229 = vmatpush1.msra.mxu0 %v228
    %230 = vmatprep.subr.mxu0 0.0
    %v231 = vand.u32 %v70, 4294901760
    %v232 = vsub.f32 %v70, %v231
    %v233 = vand.u32 %v232, 4294901760
    %v234 = vsub.f32 %v232, %v233
    %v235 = vand.u32 %v234, 4294901760
    %236 = vmatpush1.msra.mxu0 %v235
    %237 = vmatprep.subr.mxu0 0.0
    %v238 = vand.u32 %v71, 4294901760
    %v239 = vsub.f32 %v71, %v238
    %v240 = vand.u32 %v239, 4294901760
    %v241 = vsub.f32 %v239, %v240
    %v242 = vand.u32 %v241, 4294901760
    %243 = vmatpush1.msra.mxu0 %v242
    %244 = vmatprep.subr.mxu0 0.0
    %v245 = vand.u32 %v72, 4294901760
    %v246 = vsub.f32 %v72, %v245
    %v247 = vand.u32 %v246, 4294901760
    %v248 = vsub.f32 %v246, %v247
    %v249 = vand.u32 %v248, 4294901760
    %250 = vmatpush1.msra.mxu0 %v249
    %251 = vmatprep.subr.mxu0 0.0
    %v252 = vand.u32 %v73, 4294901760
    %v253 = vsub.f32 %v73, %v252
    %v254 = vand.u32 %v253, 4294901760
    %v255 = vsub.f32 %v253, %v254
    %v256 = vand.u32 %v255, 4294901760
    %257 = vmatpush1.msra.mxu0 %v256
    %258 = vmatprep.subr.mxu0 0.0
    %v259 = vand.u32 %v74, 4294901760
    %v260 = vsub.f32 %v74, %v259
    %v261 = vand.u32 %v260, 4294901760
    %v262 = vsub.f32 %v260, %v261
    %v263 = vand.u32 %v262, 4294901760
    %264 = vmatpush1.msra.mxu0 %v263
    %265 = vmatprep.subr.mxu0 0.0
    %v266 = vand.u32 %v75, 4294901760
    %v267 = vsub.f32 %v75, %v266
    %v268 = vand.u32 %v267, 4294901760
    %v269 = vsub.f32 %v267, %v268
    %v270 = vand.u32 %v269, 4294901760
    %271 = vmatpush1.msra.mxu0 %v270
    %272 = vmatprep.subr.mxu0 0.0
    %v273 = vand.u32 %v76, 4294901760
    %v274 = vsub.f32 %v76, %v273
    %v275 = vand.u32 %v274, 4294901760
    %v276 = vsub.f32 %v274, %v275
    %v277 = vand.u32 %v276, 4294901760
    %278 = vmatpush1.msra.mxu0 %v277
    %279 = vmatprep.subr.mxu0 0.0
    %v280 = vand.u32 %v77, 4294901760
    %v281 = vsub.f32 %v77, %v280
    %v282 = vand.u32 %v281, 4294901760
    %v283 = vsub.f32 %v281, %v282
    %v284 = vand.u32 %v283, 4294901760
    %285 = vmatpush1.msra.mxu0 %v284
    %286 = vmatprep.subr.mxu0 0.0
    %v287 = vand.u32 %v78, 4294901760
    %v288 = vsub.f32 %v78, %v287
    %v289 = vand.u32 %v288, 4294901760
    %v290 = vsub.f32 %v288, %v289
    %v291 = vand.u32 %v290, 4294901760
    %292 = vmatpush1.msra.mxu0 %v291
    %293 = vmatprep.subr.mxu0 0.0
    %v294 = vand.u32 %v79, 4294901760
    %v295 = vsub.f32 %v79, %v294
    %v296 = vand.u32 %v295, 4294901760
    %v297 = vsub.f32 %v295, %v296
    %v298 = vand.u32 %v297, 4294901760
    %299 = vmatpush1.msra.mxu0 %v298
    %300 = vmatprep.subr.mxu0 0.0
    %301 = vmatpush1.msra.mxu0 0.0
    %302 = vmatprep.subr.mxu0 0.0
    %303 = vmatpush1.msra.mxu0 0.0
    %304 = vmatprep.subr.mxu0 0.0
    %305 = vmatpush1.msra.mxu0 0.0
    %306 = vmatprep.subr.mxu0 0.0
    %307 = vmatpush1.msra.mxu0 0.0
    %308 = vmatprep.subr.mxu0 0.0
    %309 = vmatpush1.msra.mxu0 0.0
    %310 = vmatprep.subr.mxu0 0.0
    %311 = vmatpush1.msra.mxu0 0.0
    %312 = vmatprep.subr.mxu0 0.0
    %313 = vmatpush1.msra.mxu0 0.0
    %314 = vmatprep.subr.mxu0 0.0
    %315 = vmatpush1.msra.mxu0 0.0
    %316 = vmatprep.subr.mxu0 0.0
    %317 = vmatpush1.msra.mxu0 0.0
    %318 = vmatprep.subr.mxu0 0.0
    %319 = vmatpush1.msra.mxu0 0.0
    %320 = vmatprep.subr.mxu0 0.0
    %321 = vmatpush1.msra.mxu0 0.0
    %322 = vmatprep.subr.mxu0 0.0
    %323 = vmatpush1.msra.mxu0 0.0
    %324 = vmatprep.subr.mxu0 0.0
    %325 = vmatpush1.msra.mxu0 0.0
    %326 = vmatprep.subr.mxu0 0.0
    %327 = vmatpush1.msra.mxu0 0.0
    %328 = vmatprep.subr.mxu0 0.0
    %329 = vmatpush1.msra.mxu0 0.0
    %330 = vmatprep.subr.mxu0 0.0
    %331 = vmatpush1.msra.mxu0 0.0
    %332 = vmatprep.mubr.f32.mxu0 0.0
    %v333 = vand.u32 %v62, 4294901760
    %334 = vmatmul.mubr.f32.gmra.mrb[0].mxu0 %v333
    %v335 = vpop.f32.mrb[0].mxu0
    %v336 = vadd.f32 %v175, %v335
    %v337 = vpop.f32.mrb[0].mxu0
    %338 = vmatprep.mubr.f32.mxu0 0.0
    %v339 = vand.u32 %v63, 4294901760
    %340 = vmatmul.mubr.f32.gmra.mrb[0].mxu0 %v339
    %v341 = vpop.f32.mrb[0].mxu0
    %v342 = vadd.f32 %v185, %v341
    %v343 = vpop.f32.mrb[0].mxu0
    %344 = vdwg.mxu0
    %345 = vmatprep.subr.mxu0 0.0
    %v346 = vand.u32 %v64, 4294901760
    %v347 = vsub.f32 %v64, %v346
    %348 = vmatpush1.msra.mxu0 %v347
    %349 = vmatprep.subr.mxu0 0.0
    %v350 = vand.u32 %v65, 4294901760
    %v351 = vsub.f32 %v65, %v350
    %352 = vmatpush1.msra.mxu0 %v351
    %353 = vmatprep.subr.mxu0 0.0
    %v354 = vand.u32 %v66, 4294901760
    %v355 = vsub.f32 %v66, %v354
    %356 = vmatpush1.msra.mxu0 %v355
    %357 = vmatprep.subr.mxu0 0.0
    %v358 = vand.u32 %v67, 4294901760
    %v359 = vsub.f32 %v67, %v358
    %360 = vmatpush1.msra.mxu0 %v359
    %361 = vmatprep.subr.mxu0 0.0
    %v362 = vand.u32 %v68, 4294901760
    %v363 = vsub.f32 %v68, %v362
    %364 = vmatpush1.msra.mxu0 %v363
    %365 = vmatprep.subr.mxu0 0.0
    %v366 = vand.u32 %v69, 4294901760
    %v367 = vsub.f32 %v69, %v366
    %368 = vmatpush1.msra.mxu0 %v367
    %369 = vmatprep.subr.mxu0 0.0
    %v370 = vand.u32 %v70, 4294901760
    %v371 = vsub.f32 %v70, %v370
    %372 = vmatpush1.msra.mxu0 %v371
    %373 = vmatprep.subr.mxu0 0.0
    %v374 = vand.u32 %v71, 4294901760
    %v375 = vsub.f32 %v71, %v374
    %376 = vmatpush1.msra.mxu0 %v375
    %377 = vmatprep.subr.mxu0 0.0
    %v378 = vand.u32 %v72, 4294901760
    %v379 = vsub.f32 %v72, %v378
    %380 = vmatpush1.msra.mxu0 %v379
    %381 = vmatprep.subr.mxu0 0.0
    %v382 = vand.u32 %v73, 4294901760
    %v383 = vsub.f32 %v73, %v382
    %384 = vmatpush1.msra.mxu0 %v383
    %385 = vmatprep.subr.mxu0 0.0
    %v386 = vand.u32 %v74, 4294901760
    %v387 = vsub.f32 %v74, %v386
    %388 = vmatpush1.msra.mxu0 %v387
    %389 = vmatprep.subr.mxu0 0.0
    %v390 = vand.u32 %v75, 4294901760
    %v391 = vsub.f32 %v75, %v390
    %392 = vmatpush1.msra.mxu0 %v391
    %393 = vmatprep.subr.mxu0 0.0
    %v394 = vand.u32 %v76, 4294901760
    %v395 = vsub.f32 %v76, %v394
    %396 = vmatpush1.msra.mxu0 %v395
    %397 = vmatprep.subr.mxu0 0.0
    %v398 = vand.u32 %v77, 4294901760
    %v399 = vsub.f32 %v77, %v398
    %400 = vmatpush1.msra.mxu0 %v399
    %401 = vmatprep.subr.mxu0 0.0
    %v402 = vand.u32 %v78, 4294901760
    %v403 = vsub.f32 %v78, %v402
    %404 = vmatpush1.msra.mxu0 %v403
    %405 = vmatprep.subr.mxu0 0.0
    %v406 = vand.u32 %v79, 4294901760
    %v407 = vsub.f32 %v79, %v406
    %408 = vmatpush1.msra.mxu0 %v407
    %409 = vmatprep.subr.mxu0 0.0
    %410 = vmatpush1.msra.mxu0 0.0
    %411 = vmatprep.subr.mxu0 0.0
    %412 = vmatpush1.msra.mxu0 0.0
    %413 = vmatprep.subr.mxu0 0.0
    %414 = vmatpush1.msra.mxu0 0.0
    %415 = vmatprep.subr.mxu0 0.0
    %416 = vmatpush1.msra.mxu0 0.0
    %417 = vmatprep.subr.mxu0 0.0
    %418 = vmatpush1.msra.mxu0 0.0
    %419 = vmatprep.subr.mxu0 0.0
    %420 = vmatpush1.msra.mxu0 0.0
    %421 = vmatprep.subr.mxu0 0.0
    %422 = vmatpush1.msra.mxu0 0.0
    %423 = vmatprep.subr.mxu0 0.0
    %424 = vmatpush1.msra.mxu0 0.0
    %425 = vmatprep.subr.mxu0 0.0
    %426 = vmatpush1.msra.mxu0 0.0
    %427 = vmatprep.subr.mxu0 0.0
    %428 = vmatpush1.msra.mxu0 0.0
    %429 = vmatprep.subr.mxu0 0.0
    %430 = vmatpush1.msra.mxu0 0.0
    %431 = vmatprep.subr.mxu0 0.0
    %432 = vmatpush1.msra.mxu0 0.0
    %433 = vmatprep.subr.mxu0 0.0
    %434 = vmatpush1.msra.mxu0 0.0
    %435 = vmatprep.subr.mxu0 0.0
    %436 = vmatpush1.msra.mxu0 0.0
    %437 = vmatprep.subr.mxu0 0.0
    %438 = vmatpush1.msra.mxu0 0.0
    %439 = vmatprep.subr.mxu0 0.0
    %440 = vmatpush1.msra.mxu0 0.0
    %441 = vmatprep.mubr.f32.mxu0 0.0
    %v442 = vand.u32 %v62, 4294901760
    %v443 = vsub.f32 %v62, %v442
    %444 = vmatmul.mubr.f32.gmra.mrb[0].mxu0 %v443
    %v445 = vpop.f32.mrb[0].mxu0
    %v446 = vadd.f32 %v336, %v445
    %v447 = vpop.f32.mrb[0].mxu0
    %448 = vmatprep.mubr.f32.mxu0 0.0
    %v449 = vand.u32 %v63, 4294901760
    %v450 = vsub.f32 %v63, %v449
    %451 = vmatmul.mubr.f32.gmra.mrb[0].mxu0 %v450
    %v452 = vpop.f32.mrb[0].mxu0
    %v453 = vadd.f32 %v342, %v452
    %v454 = vpop.f32.mrb[0].mxu0
    %455 = vdwg.mxu0
    %456 = vmatprep.subr.mxu0 0.0
    %v457 = vand.u32 %v64, 4294901760
    %458 = vmatpush1.msra.mxu0 %v457
    %459 = vmatprep.subr.mxu0 0.0
    %v460 = vand.u32 %v65, 4294901760
    %461 = vmatpush1.msra.mxu0 %v460
    %462 = vmatprep.subr.mxu0 0.0
    %v463 = vand.u32 %v66, 4294901760
    %464 = vmatpush1.msra.mxu0 %v463
    %465 = vmatprep.subr.mxu0 0.0
    %v466 = vand.u32 %v67, 4294901760
    %467 = vmatpush1.msra.mxu0 %v466
    %468 = vmatprep.subr.mxu0 0.0
    %v469 = vand.u32 %v68, 4294901760
    %470 = vmatpush1.msra.mxu0 %v469
    %471 = vmatprep.subr.mxu0 0.0
    %v472 = vand.u32 %v69, 4294901760
    %473 = vmatpush1.msra.mxu0 %v472
    %474 = vmatprep.subr.mxu0 0.0
    %v475 = vand.u32 %v70, 4294901760
    %476 = vmatpush1.msra.mxu0 %v475
    %477 = vmatprep.subr.mxu0 0.0
    %v478 = vand.u32 %v71, 4294901760
    %479 = vmatpush1.msra.mxu0 %v478
    %480 = vmatprep.subr.mxu0 0.0
    %v481 = vand.u32 %v72, 4294901760
    %482 = vmatpush1.msra.mxu0 %v481
    %483 = vmatprep.subr.mxu0 0.0
    %v484 = vand.u32 %v73, 4294901760
    %485 = vmatpush1.msra.mxu0 %v484
    %486 = vmatprep.subr.mxu0 0.0
    %v487 = vand.u32 %v74, 4294901760
    %488 = vmatpush1.msra.mxu0 %v487
    %489 = vmatprep.subr.mxu0 0.0
    %v490 = vand.u32 %v75, 4294901760
    %491 = vmatpush1.msra.mxu0 %v490
    %492 = vmatprep.subr.mxu0 0.0
    %v493 = vand.u32 %v76, 4294901760
    %494 = vmatpush1.msra.mxu0 %v493
    %495 = vmatprep.subr.mxu0 0.0
    %v496 = vand.u32 %v77, 4294901760
    %497 = vmatpush1.msra.mxu0 %v496
    %498 = vmatprep.subr.mxu0 0.0
    %v499 = vand.u32 %v78, 4294901760
    %500 = vmatpush1.msra.mxu0 %v499
    %501 = vmatprep.subr.mxu0 0.0
    %v502 = vand.u32 %v79, 4294901760
    %503 = vmatpush1.msra.mxu0 %v502
    %504 = vmatprep.subr.mxu0 0.0
    %505 = vmatpush1.msra.mxu0 0.0
    %506 = vmatprep.subr.mxu0 0.0
    %507 = vmatpush1.msra.mxu0 0.0
    %508 = vmatprep.subr.mxu0 0.0
    %509 = vmatpush1.msra.mxu0 0.0
    %510 = vmatprep.subr.mxu0 0.0
    %511 = vmatpush1.msra.mxu0 0.0
    %512 = vmatprep.subr.mxu0 0.0
    %513 = vmatpush1.msra.mxu0 0.0
    %514 = vmatprep.subr.mxu0 0.0
    %515 = vmatpush1.msra.mxu0 0.0
    %516 = vmatprep.subr.mxu0 0.0
    %517 = vmatpush1.msra.mxu0 0.0
    %518 = vmatprep.subr.mxu0 0.0
    %519 = vmatpush1.msra.mxu0 0.0
    %520 = vmatprep.subr.mxu0 0.0
    %521 = vmatpush1.msra.mxu0 0.0
    %522 = vmatprep.subr.mxu0 0.0
    %523 = vmatpush1.msra.mxu0 0.0
    %524 = vmatprep.subr.mxu0 0.0
    %525 = vmatpush1.msra.mxu0 0.0
    %526 = vmatprep.subr.mxu0 0.0
    %527 = vmatpush1.msra.mxu0 0.0
    %528 = vmatprep.subr.mxu0 0.0
    %529 = vmatpush1.msra.mxu0 0.0
    %530 = vmatprep.subr.mxu0 0.0
    %531 = vmatpush1.msra.mxu0 0.0
    %532 = vmatprep.subr.mxu0 0.0
    %533 = vmatpush1.msra.mxu0 0.0
    %534 = vmatprep.subr.mxu0 0.0
    %535 = vmatpush1.msra.mxu0 0.0
    %536 = vmatprep.mubr.f32.mxu0 0.0
    %v537 = vand.u32 %v62, 4294901760
    %v538 = vsub.f32 %v62, %v537
    %v539 = vand.u32 %v538, 4294901760
    %540 = vmatmul.mubr.f32.gmra.mrb[0].mxu0 %v539
    %v541 = vpop.f32.mrb[0].mxu0
    %v542 = vadd.f32 %v446, %v541
    %v543 = vpop.f32.mrb[0].mxu0
    %544 = vmatprep.mubr.f32.mxu0 0.0
    %v545 = vand.u32 %v63, 4294901760
    %v546 = vsub.f32 %v63, %v545
    %v547 = vand.u32 %v546, 4294901760
    %548 = vmatmul.mubr.f32.gmra.mrb[0].mxu0 %v547
    %v549 = vpop.f32.mrb[0].mxu0
    %v550 = vadd.f32 %v453, %v549
    %v551 = vpop.f32.mrb[0].mxu0
    %552 = vdwg.mxu0
    %553 = vmatprep.subr.mxu0 0.0
    %v554 = vand.u32 %v64, 4294901760
    %v555 = vsub.f32 %v64, %v554
    %v556 = vand.u32 %v555, 4294901760
    %557 = vmatpush1.msra.mxu0 %v556
    %558 = vmatprep.subr.mxu0 0.0
    %v559 = vand.u32 %v65, 4294901760
    %v560 = vsub.f32 %v65, %v559
    %v561 = vand.u32 %v560, 4294901760
    %562 = vmatpush1.msra.mxu0 %v561
    %563 = vmatprep.subr.mxu0 0.0
    %v564 = vand.u32 %v66, 4294901760
    %v565 = vsub.f32 %v66, %v564
    %v566 = vand.u32 %v565, 4294901760
    %567 = vmatpush1.msra.mxu0 %v566
    %568 = vmatprep.subr.mxu0 0.0
    %v569 = vand.u32 %v67, 4294901760
    %v570 = vsub.f32 %v67, %v569
    %v571 = vand.u32 %v570, 4294901760
    %572 = vmatpush1.msra.mxu0 %v571
    %573 = vmatprep.subr.mxu0 0.0
    %v574 = vand.u32 %v68, 4294901760
    %v575 = vsub.f32 %v68, %v574
    %v576 = vand.u32 %v575, 4294901760
    %577 = vmatpush1.msra.mxu0 %v576
    %578 = vmatprep.subr.mxu0 0.0
    %v579 = vand.u32 %v69, 4294901760
    %v580 = vsub.f32 %v69, %v579
    %v581 = vand.u32 %v580, 4294901760
    %582 = vmatpush1.msra.mxu0 %v581
    %583 = vmatprep.subr.mxu0 0.0
    %v584 = vand.u32 %v70, 4294901760
    %v585 = vsub.f32 %v70, %v584
    %v586 = vand.u32 %v585, 4294901760
    %587 = vmatpush1.msra.mxu0 %v586
    %588 = vmatprep.subr.mxu0 0.0
    %v589 = vand.u32 %v71, 4294901760
    %v590 = vsub.f32 %v71, %v589
    %v591 = vand.u32 %v590, 4294901760
    %592 = vmatpush1.msra.mxu0 %v591
    %593 = vmatprep.subr.mxu0 0.0
    %v594 = vand.u32 %v72, 4294901760
    %v595 = vsub.f32 %v72, %v594
    %v596 = vand.u32 %v595, 4294901760
    %597 = vmatpush1.msra.mxu0 %v596
    %598 = vmatprep.subr.mxu0 0.0
    %v599 = vand.u32 %v73, 4294901760
    %v600 = vsub.f32 %v73, %v599
    %v601 = vand.u32 %v600, 4294901760
    %602 = vmatpush1.msra.mxu0 %v601
    %603 = vmatprep.subr.mxu0 0.0
    %v604 = vand.u32 %v74, 4294901760
    %v605 = vsub.f32 %v74, %v604
    %v606 = vand.u32 %v605, 4294901760
    %607 = vmatpush1.msra.mxu0 %v606
    %608 = vmatprep.subr.mxu0 0.0
    %v609 = vand.u32 %v75, 4294901760
    %v610 = vsub.f32 %v75, %v609
    %v611 = vand.u32 %v610, 4294901760
    %612 = vmatpush1.msra.mxu0 %v611
    %613 = vmatprep.subr.mxu0 0.0
    %v614 = vand.u32 %v76, 4294901760
    %v615 = vsub.f32 %v76, %v614
    %v616 = vand.u32 %v615, 4294901760
    %617 = vmatpush1.msra.mxu0 %v616
    %618 = vmatprep.subr.mxu0 0.0
    %v619 = vand.u32 %v77, 4294901760
    %v620 = vsub.f32 %v77, %v619
    %v621 = vand.u32 %v620, 4294901760
    %622 = vmatpush1.msra.mxu0 %v621
    %623 = vmatprep.subr.mxu0 0.0
    %v624 = vand.u32 %v78, 4294901760
    %v625 = vsub.f32 %v78, %v624
    %v626 = vand.u32 %v625, 4294901760
    %627 = vmatpush1.msra.mxu0 %v626
    %628 = vmatprep.subr.mxu0 0.0
    %v629 = vand.u32 %v79, 4294901760
    %v630 = vsub.f32 %v79, %v629
    %v631 = vand.u32 %v630, 4294901760
    %632 = vmatpush1.msra.mxu0 %v631
    %633 = vmatprep.subr.mxu0 0.0
    %634 = vmatpush1.msra.mxu0 0.0
    %635 = vmatprep.subr.mxu0 0.0
    %636 = vmatpush1.msra.mxu0 0.0
    %637 = vmatprep.subr.mxu0 0.0
    %638 = vmatpush1.msra.mxu0 0.0
    %639 = vmatprep.subr.mxu0 0.0
    %640 = vmatpush1.msra.mxu0 0.0
    %641 = vmatprep.subr.mxu0 0.0
    %642 = vmatpush1.msra.mxu0 0.0
    %643 = vmatprep.subr.mxu0 0.0
    %644 = vmatpush1.msra.mxu0 0.0
    %645 = vmatprep.subr.mxu0 0.0
    %646 = vmatpush1.msra.mxu0 0.0
    %647 = vmatprep.subr.mxu0 0.0
    %648 = vmatpush1.msra.mxu0 0.0
    %649 = vmatprep.subr.mxu0 0.0
    %650 = vmatpush1.msra.mxu0 0.0
    %651 = vmatprep.subr.mxu0 0.0
    %652 = vmatpush1.msra.mxu0 0.0
    %653 = vmatprep.subr.mxu0 0.0
    %654 = vmatpush1.msra.mxu0 0.0
    %655 = vmatprep.subr.mxu0 0.0
    %656 = vmatpush1.msra.mxu0 0.0
    %657 = vmatprep.subr.mxu0 0.0
    %658 = vmatpush1.msra.mxu0 0.0
    %659 = vmatprep.subr.mxu0 0.0
    %660 = vmatpush1.msra.mxu0 0.0
    %661 = vmatprep.subr.mxu0 0.0
    %662 = vmatpush1.msra.mxu0 0.0
    %663 = vmatprep.subr.mxu0 0.0
    %664 = vmatpush1.msra.mxu0 0.0
    %665 = vmatprep.mubr.f32.mxu0 0.0
    %v666 = vand.u32 %v62, 4294901760
    %667 = vmatmul.mubr.f32.gmra.mrb[0].mxu0 %v666
    %v668 = vpop.f32.mrb[0].mxu0
    %v669 = vadd.f32 %v542, %v668
    %v670 = vpop.f32.mrb[0].mxu0
    %671 = vmatprep.mubr.f32.mxu0 0.0
    %v672 = vand.u32 %v63, 4294901760
    %673 = vmatmul.mubr.f32.gmra.mrb[0].mxu0 %v672
    %v674 = vpop.f32.mrb[0].mxu0
    %v675 = vadd.f32 %v550, %v674
    %v676 = vpop.f32.mrb[0].mxu0
    %677 = vdwg.mxu0
    %678 = vmatprep.subr.mxu0 0.0
    %v679 = vand.u32 %v64, 4294901760
    %680 = vmatpush1.msra.mxu0 %v679
    %681 = vmatprep.subr.mxu0 0.0
    %v682 = vand.u32 %v65, 4294901760
    %683 = vmatpush1.msra.mxu0 %v682
    %684 = vmatprep.subr.mxu0 0.0
    %v685 = vand.u32 %v66, 4294901760
    %686 = vmatpush1.msra.mxu0 %v685
    %687 = vmatprep.subr.mxu0 0.0
    %v688 = vand.u32 %v67, 4294901760
    %689 = vmatpush1.msra.mxu0 %v688
    %690 = vmatprep.subr.mxu0 0.0
    %v691 = vand.u32 %v68, 4294901760
    %692 = vmatpush1.msra.mxu0 %v691
    %693 = vmatprep.subr.mxu0 0.0
    %v694 = vand.u32 %v69, 4294901760
    %695 = vmatpush1.msra.mxu0 %v694
    %696 = vmatprep.subr.mxu0 0.0
    %v697 = vand.u32 %v70, 4294901760
    %698 = vmatpush1.msra.mxu0 %v697
    %699 = vmatprep.subr.mxu0 0.0
    %v700 = vand.u32 %v71, 4294901760
    %701 = vmatpush1.msra.mxu0 %v700
    %702 = vmatprep.subr.mxu0 0.0
    %v703 = vand.u32 %v72, 4294901760
    %704 = vmatpush1.msra.mxu0 %v703
    %705 = vmatprep.subr.mxu0 0.0
    %v706 = vand.u32 %v73, 4294901760
    %707 = vmatpush1.msra.mxu0 %v706
    %708 = vmatprep.subr.mxu0 0.0
    %v709 = vand.u32 %v74, 4294901760
    %710 = vmatpush1.msra.mxu0 %v709
    %711 = vmatprep.subr.mxu0 0.0
    %v712 = vand.u32 %v75, 4294901760
    %713 = vmatpush1.msra.mxu0 %v712
    %714 = vmatprep.subr.mxu0 0.0
    %v715 = vand.u32 %v76, 4294901760
    %716 = vmatpush1.msra.mxu0 %v715
    %717 = vmatprep.subr.mxu0 0.0
    %v718 = vand.u32 %v77, 4294901760
    %719 = vmatpush1.msra.mxu0 %v718
    %720 = vmatprep.subr.mxu0 0.0
    %v721 = vand.u32 %v78, 4294901760
    %722 = vmatpush1.msra.mxu0 %v721
    %723 = vmatprep.subr.mxu0 0.0
    %v724 = vand.u32 %v79, 4294901760
    %725 = vmatpush1.msra.mxu0 %v724
    %726 = vmatprep.subr.mxu0 0.0
    %727 = vmatpush1.msra.mxu0 0.0
    %728 = vmatprep.subr.mxu0 0.0
    %729 = vmatpush1.msra.mxu0 0.0
    %730 = vmatprep.subr.mxu0 0.0
    %731 = vmatpush1.msra.mxu0 0.0
    %732 = vmatprep.subr.mxu0 0.0
    %733 = vmatpush1.msra.mxu0 0.0
    %734 = vmatprep.subr.mxu0 0.0
    %735 = vmatpush1.msra.mxu0 0.0
    %736 = vmatprep.subr.mxu0 0.0
    %737 = vmatpush1.msra.mxu0 0.0
    %738 = vmatprep.subr.mxu0 0.0
    %739 = vmatpush1.msra.mxu0 0.0
    %740 = vmatprep.subr.mxu0 0.0
    %741 = vmatpush1.msra.mxu0 0.0
    %742 = vmatprep.subr.mxu0 0.0
    %743 = vmatpush1.msra.mxu0 0.0
    %744 = vmatprep.subr.mxu0 0.0
    %745 = vmatpush1.msra.mxu0 0.0
    %746 = vmatprep.subr.mxu0 0.0
    %747 = vmatpush1.msra.mxu0 0.0
    %748 = vmatprep.subr.mxu0 0.0
    %749 = vmatpush1.msra.mxu0 0.0
    %750 = vmatprep.subr.mxu0 0.0
    %751 = vmatpush1.msra.mxu0 0.0
    %752 = vmatprep.subr.mxu0 0.0
    %753 = vmatpush1.msra.mxu0 0.0
    %754 = vmatprep.subr.mxu0 0.0
    %755 = vmatpush1.msra.mxu0 0.0
    %756 = vmatprep.subr.mxu0 0.0
    %757 = vmatpush1.msra.mxu0 0.0
    %758 = vmatprep.mubr.f32.mxu0 0.0
    %v759 = vand.u32 %v62, 4294901760
    %760 = vmatmul.mubr.f32.gmra.mrb[0].mxu0 %v759
    %v761 = vpop.f32.mrb[0].mxu0
    %v762 = vadd.f32 %v669, %v761
    %v763 = vpop.f32.mrb[0].mxu0
    %764 = vmatprep.mubr.f32.mxu0 0.0
    %v765 = vand.u32 %v63, 4294901760
    %766 = vmatmul.mubr.f32.gmra.mrb[0].mxu0 %v765
    %v767 = vpop.f32.mrb[0].mxu0
    %v768 = vadd.f32 %v675, %v767
    %v769 = vpop.f32.mrb[0].mxu0
    %770 = vdwg.mxu0
    %v771 = vtanh.pop %v762
    %v772 = vtanh.pop %v768
    %v773 = vld [vmem:[#allocation7] sm:$0xff]
    %v774 = vld [vmem:[#allocation7 + $0x8] sm:$0xff]
    %v775 = vld [vmem:[#allocation7 + $0x10] sm:$0xff]
    %v776 = vld [vmem:[#allocation7 + $0x18] sm:$0xff]
    %v777 = vld [vmem:[#allocation7 + $0x20] sm:$0xff]
    %v778 = vld [vmem:[#allocation7 + $0x28] sm:$0xff]
    %v779 = vld [vmem:[#allocation7 + $0x30] sm:$0xff]
    %v780 = vld [vmem:[#allocation7 + $0x38] sm:$0xff]
    %v781 = vld [vmem:[#allocation7 + $0x40] sm:$0xff]
    %v782 = vld [vmem:[#allocation7 + $0x48] sm:$0xff]
    %v783 = vld [vmem:[#allocation7 + $0x50] sm:$0xff]
    %v784 = vld [vmem:[#allocation7 + $0x58] sm:$0xff]
    %v785 = vld [vmem:[#allocation7 + $0x60] sm:$0xff]
    %v786 = vld [vmem:[#allocation7 + $0x68] sm:$0xff]
    %v787 = vld [vmem:[#allocation7 + $0x70] sm:$0xff]
    %v788 = vld [vmem:[#allocation7 + $0x78] sm:$0xff]
    %v789 = vld [vmem:[%s4] sm:$0x1]
    %v791 = vlaneseq
    %v792 = vshrl.u32 %v791, 7
    %v793 = vsub.s32 0, %v792
    %v794 = vrot.slane %v789, %v793
    %796 = vmatprep.subr.mxu0 0.0
    %v797 = vand.u32 %v773, 4294901760
    %798 = vmatpush1.msra.mxu0 %v797
    %799 = vmatprep.subr.mxu0 0.0
    %v800 = vand.u32 %v774, 4294901760
    %801 = vmatpush1.msra.mxu0 %v800
    %802 = vmatprep.subr.mxu0 0.0
    %v803 = vand.u32 %v775, 4294901760
    %804 = vmatpush1.msra.mxu0 %v803
    %805 = vmatprep.subr.mxu0 0.0
    %v806 = vand.u32 %v776, 4294901760
    %807 = vmatpush1.msra.mxu0 %v806
    %808 = vmatprep.subr.mxu0 0.0
    %v809 = vand.u32 %v777, 4294901760
    %810 = vmatpush1.msra.mxu0 %v809
    %811 = vmatprep.subr.mxu0 0.0
    %v812 = vand.u32 %v778, 4294901760
    %813 = vmatpush1.msra.mxu0 %v812
    %814 = vmatprep.subr.mxu0 0.0
    %v815 = vand.u32 %v779, 4294901760
    %816 = vmatpush1.msra.mxu0 %v815
    %817 = vmatprep.subr.mxu0 0.0
    %v818 = vand.u32 %v780, 4294901760
    %819 = vmatpush1.msra.mxu0 %v818
    %820 = vmatprep.subr.mxu0 0.0
    %v821 = vand.u32 %v781, 4294901760
    %822 = vmatpush1.msra.mxu0 %v821
    %823 = vmatprep.subr.mxu0 0.0
    %v824 = vand.u32 %v782, 4294901760
    %825 = vmatpush1.msra.mxu0 %v824
    %826 = vmatprep.subr.mxu0 0.0
    %v827 = vand.u32 %v783, 4294901760
    %828 = vmatpush1.msra.mxu0 %v827
    %829 = vmatprep.subr.mxu0 0.0
    %v830 = vand.u32 %v784, 4294901760
    %831 = vmatpush1.msra.mxu0 %v830
    %832 = vmatprep.subr.mxu0 0.0
    %v833 = vand.u32 %v785, 4294901760
    %834 = vmatpush1.msra.mxu0 %v833
    %835 = vmatprep.subr.mxu0 0.0
    %v836 = vand.u32 %v786, 4294901760
    %837 = vmatpush1.msra.mxu0 %v836
    %838 = vmatprep.subr.mxu0 0.0
    %v839 = vand.u32 %v787, 4294901760
    %840 = vmatpush1.msra.mxu0 %v839
    %841 = vmatprep.subr.mxu0 0.0
    %v842 = vand.u32 %v788, 4294901760
    %843 = vmatpush1.msra.mxu0 %v842
    %844 = vmatprep.subr.mxu0 0.0
    %845 = vmatpush1.msra.mxu0 0.0
    %846 = vmatprep.subr.mxu0 0.0
    %847 = vmatpush1.msra.mxu0 0.0
    %848 = vmatprep.subr.mxu0 0.0
    %849 = vmatpush1.msra.mxu0 0.0
    %850 = vmatprep.subr.mxu0 0.0
    %851 = vmatpush1.msra.mxu0 0.0
    %852 = vmatprep.subr.mxu0 0.0
    %853 = vmatpush1.msra.mxu0 0.0
    %854 = vmatprep.subr.mxu0 0.0
    %855 = vmatpush1.msra.mxu0 0.0
    %856 = vmatprep.subr.mxu0 0.0
    %857 = vmatpush1.msra.mxu0 0.0
    %858 = vmatprep.subr.mxu0 0.0
    %859 = vmatpush1.msra.mxu0 0.0
    %860 = vmatprep.subr.mxu0 0.0
    %861 = vmatpush1.msra.mxu0 0.0
    %862 = vmatprep.subr.mxu0 0.0
    %863 = vmatpush1.msra.mxu0 0.0
    %864 = vmatprep.subr.mxu0 0.0
    %865 = vmatpush1.msra.mxu0 0.0
    %866 = vmatprep.subr.mxu0 0.0
    %867 = vmatpush1.msra.mxu0 0.0
    %868 = vmatprep.subr.mxu0 0.0
    %869 = vmatpush1.msra.mxu0 0.0
    %870 = vmatprep.subr.mxu0 0.0
    %871 = vmatpush1.msra.mxu0 0.0
    %872 = vmatprep.subr.mxu0 0.0
    %873 = vmatpush1.msra.mxu0 0.0
    %874 = vmatprep.subr.mxu0 0.0
    %875 = vmatpush1.msra.mxu0 0.0
    %876 = vmatprep.mubr.f32.mxu0 0.0
    %v877 = vand.u32 %v771, 4294901760
    %v878 = vsub.f32 %v771, %v877
    %v879 = vand.u32 %v878, 4294901760
    %v880 = vsub.f32 %v878, %v879
    %v881 = vand.u32 %v880, 4294901760
    %882 = vmatmul.mubr.f32.gmra.mrb[0].mxu0 %v881
    %v883 = vpop.f32.mrb[0].mxu0
    %v884 = vadd.f32 %v794, %v883
    %v885 = vpop.f32.mrb[0].mxu0
    %886 = vmatprep.mubr.f32.mxu0 0.0
    %v887 = vand.u32 %v772, 4294901760
    %v888 = vsub.f32 %v772, %v887
    %v889 = vand.u32 %v888, 4294901760
    %v890 = vsub.f32 %v888, %v889
    %v891 = vand.u32 %v890, 4294901760
    %892 = vmatmul.mubr.f32.gmra.mrb[0].mxu0 %v891
    %v893 = vpop.f32.mrb[0].mxu0
    %v894 = vadd.f32 %v794, %v893
    %v895 = vpop.f32.mrb[0].mxu0
    %896 = vdwg.mxu0
    %897 = vmatprep.subr.mxu0 0.0
    %v898 = vand.u32 %v773, 4294901760
    %v899 = vsub.f32 %v773, %v898
    %v900 = vand.u32 %v899, 4294901760
    %v901 = vsub.f32 %v899, %v900
    %v902 = vand.u32 %v901, 4294901760
    %903 = vmatpush1.msra.mxu0 %v902
    %904 = vmatprep.subr.mxu0 0.0
    %v905 = vand.u32 %v774, 4294901760
    %v906 = vsub.f32 %v774, %v905
    %v907 = vand.u32 %v906, 4294901760
    %v908 = vsub.f32 %v906, %v907
    %v909 = vand.u32 %v908, 4294901760
    %910 = vmatpush1.msra.mxu0 %v909
    %911 = vmatprep.subr.mxu0 0.0
    %v912 = vand.u32 %v775, 4294901760
    %v913 = vsub.f32 %v775, %v912
    %v914 = vand.u32 %v913, 4294901760
    %v915 = vsub.f32 %v913, %v914
    %v916 = vand.u32 %v915, 4294901760
    %917 = vmatpush1.msra.mxu0 %v916
    %918 = vmatprep.subr.mxu0 0.0
    %v919 = vand.u32 %v776, 4294901760
    %v920 = vsub.f32 %v776, %v919
    %v921 = vand.u32 %v920, 4294901760
    %v922 = vsub.f32 %v920, %v921
    %v923 = vand.u32 %v922, 4294901760
    %924 = vmatpush1.msra.mxu0 %v923
    %925 = vmatprep.subr.mxu0 0.0
    %v926 = vand.u32 %v777, 4294901760
    %v927 = vsub.f32 %v777, %v926
    %v928 = vand.u32 %v927, 4294901760
    %v929 = vsub.f32 %v927, %v928
    %v930 = vand.u32 %v929, 4294901760
    %931 = vmatpush1.msra.mxu0 %v930
    %932 = vmatprep.subr.mxu0 0.0
    %v933 = vand.u32 %v778, 4294901760
    %v934 = vsub.f32 %v778, %v933
    %v935 = vand.u32 %v934, 4294901760
    %v936 = vsub.f32 %v934, %v935
    %v937 = vand.u32 %v936, 4294901760
    %938 = vmatpush1.msra.mxu0 %v937
    %939 = vmatprep.subr.mxu0 0.0
    %v940 = vand.u32 %v779, 4294901760
    %v941 = vsub.f32 %v779, %v940
    %v942 = vand.u32 %v941, 4294901760
    %v943 = vsub.f32 %v941, %v942
    %v944 = vand.u32 %v943, 4294901760
    %945 = vmatpush1.msra.mxu0 %v944
    %946 = vmatprep.subr.mxu0 0.0
    %v947 = vand.u32 %v780, 4294901760
    %v948 = vsub.f32 %v780, %v947
    %v949 = vand.u32 %v948, 4294901760
    %v950 = vsub.f32 %v948, %v949
    %v951 = vand.u32 %v950, 4294901760
    %952 = vmatpush1.msra.mxu0 %v951
    %953 = vmatprep.subr.mxu0 0.0
    %v954 = vand.u32 %v781, 4294901760
    %v955 = vsub.f32 %v781, %v954
    %v956 = vand.u32 %v955, 4294901760
    %v957 = vsub.f32 %v955, %v956
    %v958 = vand.u32 %v957, 4294901760
    %959 = vmatpush1.msra.mxu0 %v958
    %960 = vmatprep.subr.mxu0 0.0
    %v961 = vand.u32 %v782, 4294901760
    %v962 = vsub.f32 %v782, %v961
    %v963 = vand.u32 %v962, 4294901760
    %v964 = vsub.f32 %v962, %v963
    %v965 = vand.u32 %v964, 4294901760
    %966 = vmatpush1.msra.mxu0 %v965
    %967 = vmatprep.subr.mxu0 0.0
    %v968 = vand.u32 %v783, 4294901760
    %v969 = vsub.f32 %v783, %v968
    %v970 = vand.u32 %v969, 4294901760
    %v971 = vsub.f32 %v969, %v970
    %v972 = vand.u32 %v971, 4294901760
    %973 = vmatpush1.msra.mxu0 %v972
    %974 = vmatprep.subr.mxu0 0.0
    %v975 = vand.u32 %v784, 4294901760
    %v976 = vsub.f32 %v784, %v975
    %v977 = vand.u32 %v976, 4294901760
    %v978 = vsub.f32 %v976, %v977
    %v979 = vand.u32 %v978, 4294901760
    %980 = vmatpush1.msra.mxu0 %v979
    %981 = vmatprep.subr.mxu0 0.0
    %v982 = vand.u32 %v785, 4294901760
    %v983 = vsub.f32 %v785, %v982
    %v984 = vand.u32 %v983, 4294901760
    %v985 = vsub.f32 %v983, %v984
    %v986 = vand.u32 %v985, 4294901760
    %987 = vmatpush1.msra.mxu0 %v986
    %988 = vmatprep.subr.mxu0 0.0
    %v989 = vand.u32 %v786, 4294901760
    %v990 = vsub.f32 %v786, %v989
    %v991 = vand.u32 %v990, 4294901760
    %v992 = vsub.f32 %v990, %v991
    %v993 = vand.u32 %v992, 4294901760
    %994 = vmatpush1.msra.mxu0 %v993
    %995 = vmatprep.subr.mxu0 0.0
    %v996 = vand.u32 %v787, 4294901760
    %v997 = vsub.f32 %v787, %v996
    %v998 = vand.u32 %v997, 4294901760
    %v999 = vsub.f32 %v997, %v998
    %v1000 = vand.u32 %v999, 4294901760
    %1001 = vmatpush1.msra.mxu0 %v1000
    %1002 = vmatprep.subr.mxu0 0.0
    %v1003 = vand.u32 %v788, 4294901760
    %v1004 = vsub.f32 %v788, %v1003
    %v1005 = vand.u32 %v1004, 4294901760
    %v1006 = vsub.f32 %v1004, %v1005
    %v1007 = vand.u32 %v1006, 4294901760
    %1008 = vmatpush1.msra.mxu0 %v1007
    %1009 = vmatprep.subr.mxu0 0.0
    %1010 = vmatpush1.msra.mxu0 0.0
    %1011 = vmatprep.subr.mxu0 0.0
    %1012 = vmatpush1.msra.mxu0 0.0
    %1013 = vmatprep.subr.mxu0 0.0
    %1014 = vmatpush1.msra.mxu0 0.0
    %1015 = vmatprep.subr.mxu0 0.0
    %1016 = vmatpush1.msra.mxu0 0.0
    %1017 = vmatprep.subr.mxu0 0.0
    %1018 = vmatpush1.msra.mxu0 0.0
    %1019 = vmatprep.subr.mxu0 0.0
    %1020 = vmatpush1.msra.mxu0 0.0
    %1021 = vmatprep.subr.mxu0 0.0
    %1022 = vmatpush1.msra.mxu0 0.0
    %1023 = vmatprep.subr.mxu0 0.0
    %1024 = vmatpush1.msra.mxu0 0.0
    %1025 = vmatprep.subr.mxu0 0.0
    %1026 = vmatpush1.msra.mxu0 0.0
    %1027 = vmatprep.subr.mxu0 0.0
    %1028 = vmatpush1.msra.mxu0 0.0
    %1029 = vmatprep.subr.mxu0 0.0
    %1030 = vmatpush1.msra.mxu0 0.0
    %1031 = vmatprep.subr.mxu0 0.0
    %1032 = vmatpush1.msra.mxu0 0.0
    %1033 = vmatprep.subr.mxu0 0.0
    %1034 = vmatpush1.msra.mxu0 0.0
    %1035 = vmatprep.subr.mxu0 0.0
    %1036 = vmatpush1.msra.mxu0 0.0
    %1037 = vmatprep.subr.mxu0 0.0
    %1038 = vmatpush1.msra.mxu0 0.0
    %1039 = vmatprep.subr.mxu0 0.0
    %1040 = vmatpush1.msra.mxu0 0.0
    %1041 = vmatprep.mubr.f32.mxu0 0.0
    %v1042 = vand.u32 %v771, 4294901760
    %1043 = vmatmul.mubr.f32.gmra.mrb[0].mxu0 %v1042
    %v1044 = vpop.f32.mrb[0].mxu0
    %v1045 = vadd.f32 %v884, %v1044
    %v1046 = vpop.f32.mrb[0].mxu0
    %1047 = vmatprep.mubr.f32.mxu0 0.0
    %v1048 = vand.u32 %v772, 4294901760
    %1049 = vmatmul.mubr.f32.gmra.mrb[0].mxu0 %v1048
    %v1050 = vpop.f32.mrb[0].mxu0
    %v1051 = vadd.f32 %v894, %v1050
    %v1052 = vpop.f32.mrb[0].mxu0
    %1053 = vdwg.mxu0
    %1054 = vmatprep.subr.mxu0 0.0
    %v1055 = vand.u32 %v773, 4294901760
    %v1056 = vsub.f32 %v773, %v1055
    %1057 = vmatpush1.msra.mxu0 %v1056
    %1058 = vmatprep.subr.mxu0 0.0
    %v1059 = vand.u32 %v774, 4294901760
    %v1060 = vsub.f32 %v774, %v1059
    %1061 = vmatpush1.msra.mxu0 %v1060
    %1062 = vmatprep.subr.mxu0 0.0
    %v1063 = vand.u32 %v775, 4294901760
    %v1064 = vsub.f32 %v775, %v1063
    %1065 = vmatpush1.msra.mxu0 %v1064
    %1066 = vmatprep.subr.mxu0 0.0
    %v1067 = vand.u32 %v776, 4294901760
    %v1068 = vsub.f32 %v776, %v1067
    %1069 = vmatpush1.msra.mxu0 %v1068
    %1070 = vmatprep.subr.mxu0 0.0
    %v1071 = vand.u32 %v777, 4294901760
    %v1072 = vsub.f32 %v777, %v1071
    %1073 = vmatpush1.msra.mxu0 %v1072
    %1074 = vmatprep.subr.mxu0 0.0
    %v1075 = vand.u32 %v778, 4294901760
    %v1076 = vsub.f32 %v778, %v1075
    %1077 = vmatpush1.msra.mxu0 %v1076
    %1078 = vmatprep.subr.mxu0 0.0
    %v1079 = vand.u32 %v779, 4294901760
    %v1080 = vsub.f32 %v779, %v1079
    %1081 = vmatpush1.msra.mxu0 %v1080
    %1082 = vmatprep.subr.mxu0 0.0
    %v1083 = vand.u32 %v780, 4294901760
    %v1084 = vsub.f32 %v780, %v1083
    %1085 = vmatpush1.msra.mxu0 %v1084
    %1086 = vmatprep.subr.mxu0 0.0
    %v1087 = vand.u32 %v781, 4294901760
    %v1088 = vsub.f32 %v781, %v1087
    %1089 = vmatpush1.msra.mxu0 %v1088
    %1090 = vmatprep.subr.mxu0 0.0
    %v1091 = vand.u32 %v782, 4294901760
    %v1092 = vsub.f32 %v782, %v1091
    %1093 = vmatpush1.msra.mxu0 %v1092
    %1094 = vmatprep.subr.mxu0 0.0
    %v1095 = vand.u32 %v783, 4294901760
    %v1096 = vsub.f32 %v783, %v1095
    %1097 = vmatpush1.msra.mxu0 %v1096
    %1098 = vmatprep.subr.mxu0 0.0
    %v1099 = vand.u32 %v784, 4294901760
    %v1100 = vsub.f32 %v784, %v1099
    %1101 = vmatpush1.msra.mxu0 %v1100
    %1102 = vmatprep.subr.mxu0 0.0
    %v1103 = vand.u32 %v785, 4294901760
    %v1104 = vsub.f32 %v785, %v1103
    %1105 = vmatpush1.msra.mxu0 %v1104
    %1106 = vmatprep.subr.mxu0 0.0
    %v1107 = vand.u32 %v786, 4294901760
    %v1108 = vsub.f32 %v786, %v1107
    %1109 = vmatpush1.msra.mxu0 %v1108
    %1110 = vmatprep.subr.mxu0 0.0
    %v1111 = vand.u32 %v787, 4294901760
    %v1112 = vsub.f32 %v787, %v1111
    %1113 = vmatpush1.msra.mxu0 %v1112
    %1114 = vmatprep.subr.mxu0 0.0
    %v1115 = vand.u32 %v788, 4294901760
    %v1116 = vsub.f32 %v788, %v1115
    %1117 = vmatpush1.msra.mxu0 %v1116
    %1118 = vmatprep.subr.mxu0 0.0
    %1119 = vmatpush1.msra.mxu0 0.0
    %1120 = vmatprep.subr.mxu0 0.0
    %1121 = vmatpush1.msra.mxu0 0.0
    %1122 = vmatprep.subr.mxu0 0.0
    %1123 = vmatpush1.msra.mxu0 0.0
    %1124 = vmatprep.subr.mxu0 0.0
    %1125 = vmatpush1.msra.mxu0 0.0
    %1126 = vmatprep.subr.mxu0 0.0
    %1127 = vmatpush1.msra.mxu0 0.0
    %1128 = vmatprep.subr.mxu0 0.0
    %1129 = vmatpush1.msra.mxu0 0.0
    %1130 = vmatprep.subr.mxu0 0.0
    %1131 = vmatpush1.msra.mxu0 0.0
    %1132 = vmatprep.subr.mxu0 0.0
    %1133 = vmatpush1.msra.mxu0 0.0
    %1134 = vmatprep.subr.mxu0 0.0
    %1135 = vmatpush1.msra.mxu0 0.0
    %1136 = vmatprep.subr.mxu0 0.0
    %1137 = vmatpush1.msra.mxu0 0.0
    %1138 = vmatprep.subr.mxu0 0.0
    %1139 = vmatpush1.msra.mxu0 0.0
    %1140 = vmatprep.subr.mxu0 0.0
    %1141 = vmatpush1.msra.mxu0 0.0
    %1142 = vmatprep.subr.mxu0 0.0
    %1143 = vmatpush1.msra.mxu0 0.0
    %1144 = vmatprep.subr.mxu0 0.0
    %1145 = vmatpush1.msra.mxu0 0.0
    %1146 = vmatprep.subr.mxu0 0.0
    %1147 = vmatpush1.msra.mxu0 0.0
    %1148 = vmatprep.subr.mxu0 0.0
    %1149 = vmatpush1.msra.mxu0 0.0
    %1150 = vmatprep.mubr.f32.mxu0 0.0
    %v1151 = vand.u32 %v771, 4294901760
    %v1152 = vsub.f32 %v771, %v1151
    %1153 = vmatmul.mubr.f32.gmra.mrb[0].mxu0 %v1152
    %v1154 = vpop.f32.mrb[0].mxu0
    %v1155 = vadd.f32 %v1045, %v1154
    %v1156 = vpop.f32.mrb[0].mxu0
    %1157 = vmatprep.mubr.f32.mxu0 0.0
    %v1158 = vand.u32 %v772, 4294901760
    %v1159 = vsub.f32 %v772, %v1158
    %1160 = vmatmul.mubr.f32.gmra.mrb[0].mxu0 %v1159
    %v1161 = vpop.f32.mrb[0].mxu0
    %v1162 = vadd.f32 %v1051, %v1161
    %v1163 = vpop.f32.mrb[0].mxu0
    %1164 = vdwg.mxu0
    %1165 = vmatprep.subr.mxu0 0.0
    %v1166 = vand.u32 %v773, 4294901760
    %1167 = vmatpush1.msra.mxu0 %v1166
    %1168 = vmatprep.subr.mxu0 0.0
    %v1169 = vand.u32 %v774, 4294901760
    %1170 = vmatpush1.msra.mxu0 %v1169
    %1171 = vmatprep.subr.mxu0 0.0
    %v1172 = vand.u32 %v775, 4294901760
    %1173 = vmatpush1.msra.mxu0 %v1172
    %1174 = vmatprep.subr.mxu0 0.0
    %v1175 = vand.u32 %v776, 4294901760
    %1176 = vmatpush1.msra.mxu0 %v1175
    %1177 = vmatprep.subr.mxu0 0.0
    %v1178 = vand.u32 %v777, 4294901760
    %1179 = vmatpush1.msra.mxu0 %v1178
    %1180 = vmatprep.subr.mxu0 0.0
    %v1181 = vand.u32 %v778, 4294901760
    %1182 = vmatpush1.msra.mxu0 %v1181
    %1183 = vmatprep.subr.mxu0 0.0
    %v1184 = vand.u32 %v779, 4294901760
    %1185 = vmatpush1.msra.mxu0 %v1184
    %1186 = vmatprep.subr.mxu0 0.0
    %v1187 = vand.u32 %v780, 4294901760
    %1188 = vmatpush1.msra.mxu0 %v1187
    %1189 = vmatprep.subr.mxu0 0.0
    %v1190 = vand.u32 %v781, 4294901760
    %1191 = vmatpush1.msra.mxu0 %v1190
    %1192 = vmatprep.subr.mxu0 0.0
    %v1193 = vand.u32 %v782, 4294901760
    %1194 = vmatpush1.msra.mxu0 %v1193
    %1195 = vmatprep.subr.mxu0 0.0
    %v1196 = vand.u32 %v783, 4294901760
    %1197 = vmatpush1.msra.mxu0 %v1196
    %1198 = vmatprep.subr.mxu0 0.0
    %v1199 = vand.u32 %v784, 4294901760
    %1200 = vmatpush1.msra.mxu0 %v1199
    %1201 = vmatprep.subr.mxu0 0.0
    %v1202 = vand.u32 %v785, 4294901760
    %1203 = vmatpush1.msra.mxu0 %v1202
    %1204 = vmatprep.subr.mxu0 0.0
    %v1205 = vand.u32 %v786, 4294901760
    %1206 = vmatpush1.msra.mxu0 %v1205
    %1207 = vmatprep.subr.mxu0 0.0
    %v1208 = vand.u32 %v787, 4294901760
    %1209 = vmatpush1.msra.mxu0 %v1208
    %1210 = vmatprep.subr.mxu0 0.0
    %v1211 = vand.u32 %v788, 4294901760
    %1212 = vmatpush1.msra.mxu0 %v1211
    %1213 = vmatprep.subr.mxu0 0.0
    %1214 = vmatpush1.msra.mxu0 0.0
    %1215 = vmatprep.subr.mxu0 0.0
    %1216 = vmatpush1.msra.mxu0 0.0
    %1217 = vmatprep.subr.mxu0 0.0
    %1218 = vmatpush1.msra.mxu0 0.0
    %1219 = vmatprep.subr.mxu0 0.0
    %1220 = vmatpush1.msra.mxu0 0.0
    %1221 = vmatprep.subr.mxu0 0.0
    %1222 = vmatpush1.msra.mxu0 0.0
    %1223 = vmatprep.subr.mxu0 0.0
    %1224 = vmatpush1.msra.mxu0 0.0
    %1225 = vmatprep.subr.mxu0 0.0
    %1226 = vmatpush1.msra.mxu0 0.0
    %1227 = vmatprep.subr.mxu0 0.0
    %1228 = vmatpush1.msra.mxu0 0.0
    %1229 = vmatprep.subr.mxu0 0.0
    %1230 = vmatpush1.msra.mxu0 0.0
    %1231 = vmatprep.subr.mxu0 0.0
    %1232 = vmatpush1.msra.mxu0 0.0
    %1233 = vmatprep.subr.mxu0 0.0
    %1234 = vmatpush1.msra.mxu0 0.0
    %1235 = vmatprep.subr.mxu0 0.0
    %1236 = vmatpush1.msra.mxu0 0.0
    %1237 = vmatprep.subr.mxu0 0.0
    %1238 = vmatpush1.msra.mxu0 0.0
    %1239 = vmatprep.subr.mxu0 0.0
    %1240 = vmatpush1.msra.mxu0 0.0
    %1241 = vmatprep.subr.mxu0 0.0
    %1242 = vmatpush1.msra.mxu0 0.0
    %1243 = vmatprep.subr.mxu0 0.0
    %1244 = vmatpush1.msra.mxu0 0.0
    %1245 = vmatprep.mubr.f32.mxu0 0.0
    %v1246 = vand.u32 %v771, 4294901760
    %v1247 = vsub.f32 %v771, %v1246
    %v1248 = vand.u32 %v1247, 4294901760
    %1249 = vmatmul.mubr.f32.gmra.mrb[0].mxu0 %v1248
    %v1250 = vpop.f32.mrb[0].mxu0
    %v1251 = vadd.f32 %v1155, %v1250
    %v1252 = vpop.f32.mrb[0].mxu0
    %1253 = vmatprep.mubr.f32.mxu0 0.0
    %v1254 = vand.u32 %v772, 4294901760
    %v1255 = vsub.f32 %v772, %v1254
    %v1256 = vand.u32 %v1255, 4294901760
    %1257 = vmatmul.mubr.f32.gmra.mrb[0].mxu0 %v1256
    %v1258 = vpop.f32.mrb[0].mxu0
    %v1259 = vadd.f32 %v1162, %v1258
    %v1260 = vpop.f32.mrb[0].mxu0
    %1261 = vdwg.mxu0
    %1262 = vmatprep.subr.mxu0 0.0
    %v1263 = vand.u32 %v773, 4294901760
    %v1264 = vsub.f32 %v773, %v1263
    %v1265 = vand.u32 %v1264, 4294901760
    %1266 = vmatpush1.msra.mxu0 %v1265
    %1267 = vmatprep.subr.mxu0 0.0
    %v1268 = vand.u32 %v774, 4294901760
    %v1269 = vsub.f32 %v774, %v1268
    %v1270 = vand.u32 %v1269, 4294901760
    %1271 = vmatpush1.msra.mxu0 %v1270
    %1272 = vmatprep.subr.mxu0 0.0
    %v1273 = vand.u32 %v775, 4294901760
    %v1274 = vsub.f32 %v775, %v1273
    %v1275 = vand.u32 %v1274, 4294901760
    %1276 = vmatpush1.msra.mxu0 %v1275
    %1277 = vmatprep.subr.mxu0 0.0
    %v1278 = vand.u32 %v776, 4294901760
    %v1279 = vsub.f32 %v776, %v1278
    %v1280 = vand.u32 %v1279, 4294901760
    %1281 = vmatpush1.msra.mxu0 %v1280
    %1282 = vmatprep.subr.mxu0 0.0
    %v1283 = vand.u32 %v777, 4294901760
    %v1284 = vsub.f32 %v777, %v1283
    %v1285 = vand.u32 %v1284, 4294901760
    %1286 = vmatpush1.msra.mxu0 %v1285
    %1287 = vmatprep.subr.mxu0 0.0
    %v1288 = vand.u32 %v778, 4294901760
    %v1289 = vsub.f32 %v778, %v1288
    %v1290 = vand.u32 %v1289, 4294901760
    %1291 = vmatpush1.msra.mxu0 %v1290
    %1292 = vmatprep.subr.mxu0 0.0
    %v1293 = vand.u32 %v779, 4294901760
    %v1294 = vsub.f32 %v779, %v1293
    %v1295 = vand.u32 %v1294, 4294901760
    %1296 = vmatpush1.msra.mxu0 %v1295
    %1297 = vmatprep.subr.mxu0 0.0
    %v1298 = vand.u32 %v780, 4294901760
    %v1299 = vsub.f32 %v780, %v1298
    %v1300 = vand.u32 %v1299, 4294901760
    %1301 = vmatpush1.msra.mxu0 %v1300
    %1302 = vmatprep.subr.mxu0 0.0
    %v1303 = vand.u32 %v781, 4294901760
    %v1304 = vsub.f32 %v781, %v1303
    %v1305 = vand.u32 %v1304, 4294901760
    %1306 = vmatpush1.msra.mxu0 %v1305
    %1307 = vmatprep.subr.mxu0 0.0
    %v1308 = vand.u32 %v782, 4294901760
    %v1309 = vsub.f32 %v782, %v1308
    %v1310 = vand.u32 %v1309, 4294901760
    %1311 = vmatpush1.msra.mxu0 %v1310
    %1312 = vmatprep.subr.mxu0 0.0
    %v1313 = vand.u32 %v783, 4294901760
    %v1314 = vsub.f32 %v783, %v1313
    %v1315 = vand.u32 %v1314, 4294901760
    %1316 = vmatpush1.msra.mxu0 %v1315
    %1317 = vmatprep.subr.mxu0 0.0
    %v1318 = vand.u32 %v784, 4294901760
    %v1319 = vsub.f32 %v784, %v1318
    %v1320 = vand.u32 %v1319, 4294901760
    %1321 = vmatpush1.msra.mxu0 %v1320
    %1322 = vmatprep.subr.mxu0 0.0
    %v1323 = vand.u32 %v785, 4294901760
    %v1324 = vsub.f32 %v785, %v1323
    %v1325 = vand.u32 %v1324, 4294901760
    %1326 = vmatpush1.msra.mxu0 %v1325
    %1327 = vmatprep.subr.mxu0 0.0
    %v1328 = vand.u32 %v786, 4294901760
    %v1329 = vsub.f32 %v786, %v1328
    %v1330 = vand.u32 %v1329, 4294901760
    %1331 = vmatpush1.msra.mxu0 %v1330
    %1332 = vmatprep.subr.mxu0 0.0
    %v1333 = vand.u32 %v787, 4294901760
    %v1334 = vsub.f32 %v787, %v1333
    %v1335 = vand.u32 %v1334, 4294901760
    %1336 = vmatpush1.msra.mxu0 %v1335
    %1337 = vmatprep.subr.mxu0 0.0
    %v1338 = vand.u32 %v788, 4294901760
    %v1339 = vsub.f32 %v788, %v1338
    %v1340 = vand.u32 %v1339, 4294901760
    %1341 = vmatpush1.msra.mxu0 %v1340
    %1342 = vmatprep.subr.mxu0 0.0
    %1343 = vmatpush1.msra.mxu0 0.0
    %1344 = vmatprep.subr.mxu0 0.0
    %1345 = vmatpush1.msra.mxu0 0.0
    %1346 = vmatprep.subr.mxu0 0.0
    %1347 = vmatpush1.msra.mxu0 0.0
    %1348 = vmatprep.subr.mxu0 0.0
    %1349 = vmatpush1.msra.mxu0 0.0
    %1350 = vmatprep.subr.mxu0 0.0
    %1351 = vmatpush1.msra.mxu0 0.0
    %1352 = vmatprep.subr.mxu0 0.0
    %1353 = vmatpush1.msra.mxu0 0.0
    %1354 = vmatprep.subr.mxu0 0.0
    %1355 = vmatpush1.msra.mxu0 0.0
    %1356 = vmatprep.subr.mxu0 0.0
    %1357 = vmatpush1.msra.mxu0 0.0
    %1358 = vmatprep.subr.mxu0 0.0
    %1359 = vmatpush1.msra.mxu0 0.0
    %1360 = vmatprep.subr.mxu0 0.0
    %1361 = vmatpush1.msra.mxu0 0.0
    %1362 = vmatprep.subr.mxu0 0.0
    %1363 = vmatpush1.msra.mxu0 0.0
    %1364 = vmatprep.subr.mxu0 0.0
    %1365 = vmatpush1.msra.mxu0 0.0
    %1366 = vmatprep.subr.mxu0 0.0
    %1367 = vmatpush1.msra.mxu0 0.0
    %1368 = vmatprep.subr.mxu0 0.0
    %1369 = vmatpush1.msra.mxu0 0.0
    %1370 = vmatprep.subr.mxu0 0.0
    %1371 = vmatpush1.msra.mxu0 0.0
    %1372 = vmatprep.subr.mxu0 0.0
    %1373 = vmatpush1.msra.mxu0 0.0
    %1374 = vmatprep.mubr.f32.mxu0 0.0
    %v1375 = vand.u32 %v771, 4294901760
    %1376 = vmatmul.mubr.f32.gmra.mrb[0].mxu0 %v1375
    %v1377 = vpop.f32.mrb[0].mxu0
    %v1378 = vadd.f32 %v1251, %v1377
    %v1379 = vpop.f32.mrb[0].mxu0
    %1380 = vmatprep.mubr.f32.mxu0 0.0
    %v1381 = vand.u32 %v772, 4294901760
    %1382 = vmatmul.mubr.f32.gmra.mrb[0].mxu0 %v1381
    %v1383 = vpop.f32.mrb[0].mxu0
    %v1384 = vadd.f32 %v1259, %v1383
    %v1385 = vpop.f32.mrb[0].mxu0
    %1386 = vdwg.mxu0
    %1387 = vmatprep.subr.mxu0 0.0
    %v1388 = vand.u32 %v773, 4294901760
    %1389 = vmatpush1.msra.mxu0 %v1388
    %1390 = vmatprep.subr.mxu0 0.0
    %v1391 = vand.u32 %v774, 4294901760
    %1392 = vmatpush1.msra.mxu0 %v1391
    %1393 = vmatprep.subr.mxu0 0.0
    %v1394 = vand.u32 %v775, 4294901760
    %1395 = vmatpush1.msra.mxu0 %v1394
    %1396 = vmatprep.subr.mxu0 0.0
    %v1397 = vand.u32 %v776, 4294901760
    %1398 = vmatpush1.msra.mxu0 %v1397
    %1399 = vmatprep.subr.mxu0 0.0
    %v1400 = vand.u32 %v777, 4294901760
    %1401 = vmatpush1.msra.mxu0 %v1400
    %1402 = vmatprep.subr.mxu0 0.0
    %v1403 = vand.u32 %v778, 4294901760
    %1404 = vmatpush1.msra.mxu0 %v1403
    %1405 = vmatprep.subr.mxu0 0.0
    %v1406 = vand.u32 %v779, 4294901760
    %1407 = vmatpush1.msra.mxu0 %v1406
    %1408 = vmatprep.subr.mxu0 0.0
    %v1409 = vand.u32 %v780, 4294901760
    %1410 = vmatpush1.msra.mxu0 %v1409
    %1411 = vmatprep.subr.mxu0 0.0
    %v1412 = vand.u32 %v781, 4294901760
    %1413 = vmatpush1.msra.mxu0 %v1412
    %1414 = vmatprep.subr.mxu0 0.0
    %v1415 = vand.u32 %v782, 4294901760
    %1416 = vmatpush1.msra.mxu0 %v1415
    %1417 = vmatprep.subr.mxu0 0.0
    %v1418 = vand.u32 %v783, 4294901760
    %1419 = vmatpush1.msra.mxu0 %v1418
    %1420 = vmatprep.subr.mxu0 0.0
    %v1421 = vand.u32 %v784, 4294901760
    %1422 = vmatpush1.msra.mxu0 %v1421
    %1423 = vmatprep.subr.mxu0 0.0
    %v1424 = vand.u32 %v785, 4294901760
    %1425 = vmatpush1.msra.mxu0 %v1424
    %1426 = vmatprep.subr.mxu0 0.0
    %v1427 = vand.u32 %v786, 4294901760
    %1428 = vmatpush1.msra.mxu0 %v1427
    %1429 = vmatprep.subr.mxu0 0.0
    %v1430 = vand.u32 %v787, 4294901760
    %1431 = vmatpush1.msra.mxu0 %v1430
    %1432 = vmatprep.subr.mxu0 0.0
    %v1433 = vand.u32 %v788, 4294901760
    %1434 = vmatpush1.msra.mxu0 %v1433
    %1435 = vmatprep.subr.mxu0 0.0
    %1436 = vmatpush1.msra.mxu0 0.0
    %1437 = vmatprep.subr.mxu0 0.0
    %1438 = vmatpush1.msra.mxu0 0.0
    %1439 = vmatprep.subr.mxu0 0.0
    %1440 = vmatpush1.msra.mxu0 0.0
    %1441 = vmatprep.subr.mxu0 0.0
    %1442 = vmatpush1.msra.mxu0 0.0
    %1443 = vmatprep.subr.mxu0 0.0
    %1444 = vmatpush1.msra.mxu0 0.0
    %1445 = vmatprep.subr.mxu0 0.0
    %1446 = vmatpush1.msra.mxu0 0.0
    %1447 = vmatprep.subr.mxu0 0.0
    %1448 = vmatpush1.msra.mxu0 0.0
    %1449 = vmatprep.subr.mxu0 0.0
    %1450 = vmatpush1.msra.mxu0 0.0
    %1451 = vmatprep.subr.mxu0 0.0
    %1452 = vmatpush1.msra.mxu0 0.0
    %1453 = vmatprep.subr.mxu0 0.0
    %1454 = vmatpush1.msra.mxu0 0.0
    %1455 = vmatprep.subr.mxu0 0.0
    %1456 = vmatpush1.msra.mxu0 0.0
    %1457 = vmatprep.subr.mxu0 0.0
    %1458 = vmatpush1.msra.mxu0 0.0
    %1459 = vmatprep.subr.mxu0 0.0
    %1460 = vmatpush1.msra.mxu0 0.0
    %1461 = vmatprep.subr.mxu0 0.0
    %1462 = vmatpush1.msra.mxu0 0.0
    %1463 = vmatprep.subr.mxu0 0.0
    %1464 = vmatpush1.msra.mxu0 0.0
    %1465 = vmatprep.subr.mxu0 0.0
    %1466 = vmatpush1.msra.mxu0 0.0
    %1467 = vmatprep.mubr.f32.mxu0 0.0
    %v1468 = vand.u32 %v771, 4294901760
    %1469 = vmatmul.mubr.f32.gmra.mrb[0].mxu0 %v1468
    %v1470 = vpop.f32.mrb[0].mxu0
    %v1471 = vadd.f32 %v1378, %v1470
    %v1472 = vpop.f32.mrb[0].mxu0
    %1473 = vmatprep.mubr.f32.mxu0 0.0
    %v1474 = vand.u32 %v772, 4294901760
    %1475 = vmatmul.mubr.f32.gmra.mrb[0].mxu0 %v1474
    %v1476 = vpop.f32.mrb[0].mxu0
    %v1477 = vadd.f32 %v1384, %v1476
    %v1478 = vpop.f32.mrb[0].mxu0
    %1479 = vdwg.mxu0
    %v1480 = vadd.f32 %v62, %v1471
    %v1481 = vadd.f32 %v63, %v1477
    %1482 = vst [vmem:[#allocation8] sm:$0xff] %v1480
    %1483 = vst [vmem:[#allocation8 + $0x8] sm:$0xff] %v1481
    // Predicated region
    $region34: #{tpu_custom_call.1} parent=1 // pred_check
      _
    $region35: #{tpu_custom_call.1} parent=1 // pred_check_branch
      %1485 = sbr.rel (0) target = $region37
    $region36: #{tpu_custom_call.1} parent=1 // pred_region
      %s1487 = ssub.s32 256, 256
      %1488 = vsyncadd [#allocation4], %s1487
      %s1489 = sshll.u32 [#allocation8], 4
      %s1490 = int_to_ptr.vmem [resolvable:$true] %s1489
      %1495 = dma.vmem_to_hbm [thread:$0]  %s1490, 256, %s5, [#allocation4], 128, 128, 8
    $region37: #{tpu_custom_call.1} parent=1 // pred_fallthru
      _
    // Predicated region
    $region38: #{tpu_custom_call.1} parent=1 // pred_check
      _
    $region39: #{tpu_custom_call.1} parent=1 // pred_check_branch
      %1497 = sbr.rel (0) target = $region41
    $region40: #{tpu_custom_call.1} parent=1 // pred_region
      %1498 = dma.done [#allocation4], 256
    $region41: #{tpu_custom_call.1} parent=1 // pred_fallthru
      _
    %1499 = vsyncpa [#allocation3], 1
    %1500 = vsyncpa [#allocation6], 1
    %1501 = vsyncpa [#allocation4], 1

</llo_original>
